<compile_context>
chip_gen: v7x
topology: tpu7x:2x2x1
jax: 0.10.0
libtpu: 0.0.40
codegen_flags: <defaults>
</compile_context>

<pallas_src>
import functools

import jax
import jax.numpy as jnp
from jax.experimental import pallas as pl
from jax.experimental.pallas import tpu as pltpu


def _embedding_kernel(ids_ref, tok_tab_ref, pos_tab_ref, out_ref, *, tb, seq_len):
    """One grid step = TB batch rows, flattened to (TB*S, E).

    ids_ref:     VMEM (TB*S, 1) int32 — token ids for this batch block
    tok_tab_ref: VMEM (V, E)    f32   — token embedding table (resident, single-buffered)
    pos_tab_ref: VMEM (S, E)    f32   — position embedding table (resident, single-buffered)
    out_ref:     VMEM (TB*S, E) f32
    """
    n = tb * seq_len
    vocab = tok_tab_ref.shape[0]

    # Vectorized gather as a one-hot matmul on the MXU: (N, V) @ (V, E) -> (N, E).
    ids = ids_ref[...]                                             # (N, 1) int32
    iota_v = jax.lax.broadcasted_iota(jnp.int32, (n, vocab), 1)    # (N, V)
    onehot = (ids == iota_v).astype(tok_tab_ref.dtype)             # exact 0/1
    tok = jnp.dot(
        onehot,
        tok_tab_ref[...],
        preferred_element_type=jnp.float32,
        precision=jax.lax.Precision.HIGHEST,                       # exact row copy in f32
    )                                                              # (N, E)

    # Position embeddings, tiled over the TB batch rows (leading-dim tile only:
    # layout-preserving, no lane movement).
    pos = jnp.tile(pos_tab_ref[...], (tb, 1))                      # (N, E)

    # Single vector add + single store for the whole batch block.
    out_ref[...] = (tok + pos).astype(out_ref.dtype)
    # Dropout: identity (eval semantics).


def _padded_bytes(rows, cols, itemsize):
    """VMEM footprint of a 2-D f32/i32 tile after (8, 128) padding."""
    pr = -(-rows // 8) * 8
    pc = -(-cols // 128) * 128
    return pr * pc * itemsize


def _pick_batch_block(batch, seq_len, vocab):
    """Largest TB that divides B, keeps >= 2 grid steps (v7x has 2 TCs), and keeps the
    one-hot intermediate modest."""
    if batch <= 1:
        return 1
    onehot_budget = 4 * 1024 * 1024
    best = 1
    for tb in range(1, batch // 2 + 1):
        if batch % tb == 0 and tb * seq_len * vocab * 4 <= onehot_budget:
            best = tb
    return best


def transformer_embedding(batch_seqs, token_table, pos_table):
    """batch_seqs: (B, S) int32; token_table: (V, E) f32; pos_table: (max_len, E) f32."""
    B, S = batch_seqs.shape
    V, E = token_table.shape
    max_len = pos_table.shape[0]
    # The PyTorch module adds the FULL position table, so S must equal max_len.
    assert S == max_len, "TransformerEmbedding requires seq_len == max_len"

    tok_bytes = _padded_bytes(V, E, 4)
    pos_bytes = _padded_bytes(max_len, E, 4)
    # Resident-table path only; see TODO(synk) above for the streaming large-vocab path.
    assert tok_bytes + pos_bytes < 48 * 1024 * 1024, "token table too large for resident path"

    tb = _pick_batch_block(B, S, V)
    n_blk = tb * S
    grid = (B // tb,)

    # VMEM budget: single-buffered tables + double-buffered ids/out blocks + one-hot
    # intermediate + generous compiler headroom; capped under v7x's 64 MiB physical VMEM.
    vmem_limit = (
        tok_bytes
        + pos_bytes
        + 2 * _padded_bytes(n_blk, E, 4)
        + 2 * _padded_bytes(n_blk, 1, 4)
        + _padded_bytes(n_blk, V, 4)
        + (16 << 20)
    )
    vmem_limit = min(vmem_limit, 60 * 1024 * 1024)

    ids_flat = batch_seqs.reshape(B * S, 1).astype(jnp.int32)

    out_flat = pl.pallas_call(
        functools.partial(_embedding_kernel, tb=tb, seq_len=S),
        out_shape=jax.ShapeDtypeStruct((B * S, E), jnp.float32),
        grid_spec=pltpu.PrefetchScalarGridSpec(
            num_scalar_prefetch=0,
            grid=grid,
            in_specs=[
                # Token ids for this batch block.
                pl.BlockSpec((n_blk, 1), lambda i: (i, 0)),
                # Grid-invariant tables: constant block index (DMA'd once) and
                # single-buffered so they don't pay double-buffer VMEM on v7x.
                pl.BlockSpec((V, E), lambda i: (0, 0), pipeline_mode=pl.Buffered(1)),
                pl.BlockSpec((max_len, E), lambda i: (0, 0), pipeline_mode=pl.Buffered(1)),
            ],
            out_specs=pl.BlockSpec((n_blk, E), lambda i: (i, 0)),
        ),
        compiler_params=pltpu.CompilerParams(
            dimension_semantics=("parallel",),   # batch blocks are independent
            vmem_limit_bytes=int(vmem_limit),
        ),
    )(ids_flat, token_table, pos_table)

    return out_flat.reshape(B, S, E)


def init_embedding_params(key, item_num, emb_size, max_len):
    k_tok, k_pos = jax.random.split(key, 2)
    token_table = 0.02 * jax.random.normal(k_tok, (item_num, emb_size), jnp.float32)
    # nn.Embedding(padding_idx=0): the padding row is zero-initialized.
    token_table = token_table.at[0].set(0.0)
    pos_table = 0.02 * jax.random.normal(k_pos, (max_len, emb_size), jnp.float32)
    return token_table, pos_table


if __name__ == "__main__":
    # Small config consistent with the module: item_num=50, emb_size=32, max_len=8, B=2.
    item_num = 50
    emb_size = 32
    max_len = 8
    B = 2

    key = jax.random.PRNGKey(0)
    k_params, k_ids = jax.random.split(key, 2)

    token_table, pos_table = init_embedding_params(k_params, item_num, emb_size, max_len)

    batch_seqs = jax.random.randint(k_ids, (B, max_len), 0, item_num, jnp.int32)
    batch_seqs = batch_seqs.at[1, -2:].set(0)   # trailing padding tokens (id 0)

    out = transformer_embedding(batch_seqs, token_table, pos_table)
    jax.block_until_ready(out)

    # Pure-JAX reference (dropout is identity in eval mode).
    ref = jnp.take(token_table, batch_seqs, axis=0) + pos_table[None, :, :]

    assert out.shape == (B, max_len, emb_size)
    assert bool(jnp.all(jnp.isfinite(out)))
    assert bool(jnp.allclose(out, ref, atol=1e-5, rtol=1e-5))
    print("KERNEL_OK")
</pallas_src>

<mosaic_0001>
module attributes {stable_mosaic.version = 11 : i64} {
  func.func @_embedding_kernel(%arg0: i32, %arg1: memref<8x1xi32, #tpu.memory_space<vmem>>, %arg2: memref<50x32xf32, #tpu.memory_space<vmem>>, %arg3: memref<8x32xf32, #tpu.memory_space<vmem>>, %arg4: memref<8x32xf32, #tpu.memory_space<vmem>>) attributes {dimension_semantics = [#tpu.dimension_semantics<parallel>], iteration_bounds = array<i64: 2>, scalar_prefetch = 0 : i64, scratch_operands = 0 : i64, tpu.core_type = #tpu.core_type<tc>, window_params = [{transform_indices = @transform_0, window_bounds = array<i64: 8, 1>}, {pipeline_mode = #tpu.pipeline_mode<synchronous>, transform_indices = @transform_1, window_bounds = array<i64: 50, 32>}, {pipeline_mode = #tpu.pipeline_mode<synchronous>, transform_indices = @transform_2, window_bounds = array<i64: 8, 32>}, {transform_indices = @transform_3, window_bounds = array<i64: 8, 32>}]} {
    %c0 = arith.constant 0 : index
    %c0_0 = arith.constant 0 : index
    %0 = vector.load %arg1[%c0, %c0_0] : memref<8x1xi32, #tpu.memory_space<vmem>>, vector<8x1xi32>
    %1 = tpu.iota {dimensions = array<i32: 1>} : vector<8x50xi32>
    %2 = vector.broadcast %0 : vector<8x1xi32> to vector<8x50xi32>
    %3 = arith.cmpi eq, %2, %1 : vector<8x50xi32>
    %4 = arith.extui %3 : vector<8x50xi1> to vector<8x50xi32>
    %5 = arith.sitofp %4 : vector<8x50xi32> to vector<8x50xf32>
    %c0_1 = arith.constant 0 : index
    %c0_2 = arith.constant 0 : index
    %6 = vector.load %arg2[%c0_1, %c0_2] : memref<50x32xf32, #tpu.memory_space<vmem>>, vector<50x32xf32>
    %cst = arith.constant dense<0.000000e+00> : vector<8x32xf32>
    %7 = tpu.matmul %5, %6, %cst {dimension_numbers = #tpu.dot_dimension_numbers<[1], [0], [0], [1], [0, 0, 1, 1], [], []>, precision = #tpu.contract_precision<fp32>} : vector<8x50xf32>, vector<50x32xf32>, vector<8x32xf32> -> vector<8x32xf32>
    %c0_3 = arith.constant 0 : index
    %c0_4 = arith.constant 0 : index
    %8 = vector.load %arg3[%c0_3, %c0_4] : memref<8x32xf32, #tpu.memory_space<vmem>>, vector<8x32xf32>
    %9 = arith.addf %7, %8 : vector<8x32xf32>
    %c0_5 = arith.constant 0 : index
    %c0_6 = arith.constant 0 : index
    %10 = vector.load %arg4[%c0_5, %c0_6] : memref<8x32xf32, #tpu.memory_space<vmem>>, vector<8x32xf32>
    tpu.vector_store %arg4[%c0_5, %c0_6], %9 {strides = array<i32>} : memref<8x32xf32, #tpu.memory_space<vmem>>, vector<8x32xf32>,
    return
  }
  func.func @transform_0(%arg0: i32) -> (i32, i32) {
    %c0_i32 = arith.constant 0 : i32
    %c0_i32_0 = arith.constant 0 : i32
    return %arg0, %c0_i32 : i32, i32
  }
  func.func @transform_1(%arg0: i32) -> (i32, i32) {
    %c0_i32 = arith.constant 0 : i32
    %c0_i32_0 = arith.constant 0 : i32
    %c0_i32_1 = arith.constant 0 : i32
    return %c0_i32, %c0_i32_0 : i32, i32
  }
  func.func @transform_2(%arg0: i32) -> (i32, i32) {
    %c0_i32 = arith.constant 0 : i32
    %c0_i32_0 = arith.constant 0 : i32
    %c0_i32_1 = arith.constant 0 : i32
    return %c0_i32, %c0_i32_0 : i32, i32
  }
  func.func @transform_3(%arg0: i32) -> (i32, i32) {
    %c0_i32 = arith.constant 0 : i32
    %c0_i32_0 = arith.constant 0 : i32
    return %arg0, %c0_i32 : i32, i32
  }
}

</mosaic_0001>

<llo_original>
// kernel: tpu_custom_call.1
$region0: #{tpu_custom_call.1}
  #allocation0 [shape = 'u32[]', space=smem, size = 0x4, offset = 0x4, fixed_abs, tag = 'smem constant byte address 0x4 - core index']
  #allocation1 [shape = 'u32[144,128]{1,0:T(1,128)}', space=vmem, size = 0x12000, scoped, tag = 'internal scratch']
  %s0 = inlined_call_operand.vmem [shape: s32[16,1], index: 0, kind: input, shape index: {}]
  %s1 = inlined_call_operand.vmem [shape: f32[50,32], index: 1, kind: input, shape index: {}]
  %s2 = inlined_call_operand.vmem [shape: f32[8,32], index: 2, kind: input, shape index: {}]
  %s3 = inlined_call_operand.hbm [shape: f32[16,32], index: 3, kind: output, shape index: {}]
  %s4 = sld [smem:[#allocation0]]
  $region45: #{tpu_custom_call.1} parent=0
    _
  %s6 = ssub.s32 1, %s4
  %s7 = scalar_select 0, %s6, %s4
  $region1: #{tpu_custom_call.1} parent=0
    #allocation2 [shape = 'u8[8192]{0}', space=vmem, size = 0x2000, scoped, tag = 'output window, operand 0']
    #allocation3 [shape = 's32[2]{0}', space=sflag, size = 0x8, scoped, tag = 'scoped memory for tpu_custom_call.1']
    %8 = vsyncpa [#allocation3], 0
    %s9 = scalar_lea.sflag [#allocation3], 1
    %10 = vsyncpa %s9, 0
    loop: start=0, step=1, limit=4
    $region2: #{tpu_custom_call.1} parent=1 // loop_pre_header
      _
    $region3: #{tpu_custom_call.1} parent=1 // loop_header
      %s12 = sphi 0, %s16
      %p13 = scmp.ge.s32.totalorder %s12, 4
      %s22 = sphi 0, %s24
      %s25 = sphi 0, %s22
      %s26 = sphi 0, %s25
      %s42 = sphi 0, %s26
      %s46 = sphi 0, %s46
      %s48 = sphi 0, %s46
      %s49 = sphi 0, %s48
      %s63 = sphi 0, %s49
      %s67 = sphi 0, %s67
      %s69 = sphi 0, %s67
      %s70 = sphi 0, %s69
      %s84 = sphi 0, %s70
      %s90 = sphi 0, %s92
      %s93 = sphi 0, %s90
      %s94 = sphi 0, %s93
      %s110 = sphi 0, %s94
    $region4: #{tpu_custom_call.1} parent=1 // loop_header_branch
      %15 = sbr.rel (%p13) target = $region8
    $region5: #{tpu_custom_call.1} parent=1 // loop_body
      %s17 = ssub.s32 %s12, 1
      %s18 = ssub.s32 %s12, 2
      %s19 = sadd.s32 %s12, 1
      %s20 = ssub.s32 %s12, %s19
      %p21 = scmp.eq.s32.totalorder %s20, 0
      %s23 = sadd.s32 %s22, 1
      %s24 = scalar_select %p21, %s22, %s23
      %p27 = pneg %p21
      %p28 = scmp.eq.s32.totalorder %s12, 1
      %p29 = por %p27, %p28
      %p30 = scmp.ne.s32.totalorder %s22, %s25
      %p31 = scmp.eq.s32.totalorder %s12, 0
      %p32 = por %p30, %p31
      %p33 = scmp.ne.s32.totalorder %s22, %s25
      %p34 = scmp.eq.s32.totalorder %s17, 1
      %p35 = por %p33, %p34
      %p36 = scmp.ne.s32.totalorder %s25, %s26
      %p37 = scmp.eq.s32.totalorder %s17, 0
      %p38 = por %p36, %p37
      %p39 = scmp.ne.s32.totalorder %s25, %s26
      %p40 = scmp.eq.s32.totalorder %s18, 1
      %p41 = por %p39, %p40
      %p43 = scmp.ne.s32.totalorder %s26, %s42
      %p44 = scmp.eq.s32.totalorder %s18, 0
      %p45 = por %p43, %p44
      %s47 = sadd.s32 %s46, 1
      %p50 = scmp.eq.s32.totalorder %s12, 1
      %p51 = scmp.ne.s32.totalorder %s46, %s48
      %p52 = scmp.eq.s32.totalorder %s12, 0
      %p53 = por %p51, %p52
      %p54 = scmp.ne.s32.totalorder %s46, %s48
      %p55 = scmp.eq.s32.totalorder %s17, 1
      %p56 = por %p54, %p55
      %p57 = scmp.ne.s32.totalorder %s48, %s49
      %p58 = scmp.eq.s32.totalorder %s17, 0
      %p59 = por %p57, %p58
      %p60 = scmp.ne.s32.totalorder %s48, %s49
      %p61 = scmp.eq.s32.totalorder %s18, 1
      %p62 = por %p60, %p61
      %p64 = scmp.ne.s32.totalorder %s49, %s63
      %p65 = scmp.eq.s32.totalorder %s18, 0
      %p66 = por %p64, %p65
      %s68 = sadd.s32 %s67, 1
      %p71 = scmp.eq.s32.totalorder %s12, 1
      %p72 = scmp.ne.s32.totalorder %s67, %s69
      %p73 = scmp.eq.s32.totalorder %s12, 0
      %p74 = por %p72, %p73
      %p75 = scmp.ne.s32.totalorder %s67, %s69
      %p76 = scmp.eq.s32.totalorder %s17, 1
      %p77 = por %p75, %p76
      %p78 = scmp.ne.s32.totalorder %s69, %s70
      %p79 = scmp.eq.s32.totalorder %s17, 0
      %p80 = por %p78, %p79
      %p81 = scmp.ne.s32.totalorder %s69, %s70
      %p82 = scmp.eq.s32.totalorder %s18, 1
      %p83 = por %p81, %p82
      %p85 = scmp.ne.s32.totalorder %s70, %s84
      %p86 = scmp.eq.s32.totalorder %s18, 0
      %p87 = por %p85, %p86
      %s88 = ssub.s32 %s12, %s19
      %p89 = scmp.eq.s32.totalorder %s88, 0
      %s91 = sadd.s32 %s90, 1
      %s92 = scalar_select %p89, %s90, %s91
      %p95 = pneg %p89
      %p96 = scmp.eq.s32.totalorder %s12, 1
      %p97 = por %p95, %p96
      %p98 = scmp.ne.s32.totalorder %s90, %s93
      %p99 = scmp.eq.s32.totalorder %s12, 0
      %p100 = por %p98, %p99
      %p101 = scmp.ne.s32.totalorder %s90, %s93
      %p102 = scmp.eq.s32.totalorder %s17, 1
      %p103 = por %p101, %p102
      %p104 = scmp.ne.s32.totalorder %s93, %s94
      %p105 = scmp.eq.s32.totalorder %s17, 0
      %p106 = por %p104, %p105
      %p107 = scmp.ne.s32.totalorder %s93, %s94
      %p108 = scmp.eq.s32.totalorder %s18, 1
      %p109 = por %p107, %p108
      %p111 = scmp.ne.s32.totalorder %s94, %s110
      %p112 = scmp.eq.s32.totalorder %s18, 0
      %p113 = por %p111, %p112
      %p114 = scmp.le.s32.totalorder 1, %s12
      %p115 = scmp.lt.s32.totalorder %s12, 3
      %p116 = pnand %p114, %p115
      %p117 = pneg %p116
      // Predicated region
      $region9: #{tpu_custom_call.1} parent=5 // pred_check
        _
      $region10: #{tpu_custom_call.1} parent=5 // pred_check_branch
        %119 = sbr.rel (%p116) target = $region12
      $region11: #{tpu_custom_call.1} parent=5 // pred_region
        %s120 = ssub.s32 %s12, 1
        // Predicated region
        $region13: #{tpu_custom_call.1} parent=11 // pred_check
          %p121 = pneg %p59
        $region14: #{tpu_custom_call.1} parent=11 // pred_check_branch
          %123 = sbr.rel (%p121) target = $region16
        $region15: #{tpu_custom_call.1} parent=11 // pred_region
          _
        $region16: #{tpu_custom_call.1} parent=11 // pred_fallthru
          _
        // Predicated region
        $region17: #{tpu_custom_call.1} parent=11 // pred_check
          %p124 = pneg %p80
        $region18: #{tpu_custom_call.1} parent=11 // pred_check_branch
          %126 = sbr.rel (%p124) target = $region20
        $region19: #{tpu_custom_call.1} parent=11 // pred_region
          _
        $region20: #{tpu_custom_call.1} parent=11 // pred_fallthru
          _
      $region12: #{tpu_custom_call.1} parent=5 // pred_fallthru
        _
      %p127 = scmp.lt.s32.totalorder %s12, 2
      // Predicated region
      $region21: #{tpu_custom_call.1} parent=5 // pred_check
        %p128 = pneg %p127
      $region22: #{tpu_custom_call.1} parent=5 // pred_check_branch
        %130 = sbr.rel (%p128) target = $region24
      $region23: #{tpu_custom_call.1} parent=5 // pred_region
        // Predicated region
        $region25: #{tpu_custom_call.1} parent=23 // pred_check
          %p131 = pneg %p32
        $region26: #{tpu_custom_call.1} parent=23 // pred_check_branch
          %133 = sbr.rel (%p131) target = $region28
        $region27: #{tpu_custom_call.1} parent=23 // pred_region
          %p134 = scmp.lt.s32.totalorder %s12, 1
          %s135 = scalar_select %p134, %s12, 1
          %s136 = smul.addr %s135, 8
          %s137 = scalar_lea.vmem %s0, %s136
        $region28: #{tpu_custom_call.1} parent=23 // pred_fallthru
          _
      $region24: #{tpu_custom_call.1} parent=5 // pred_fallthru
        _
      %p138 = scmp.le.s32.totalorder 1, %s12
      %p139 = scmp.lt.s32.totalorder %s12, 3
      %p140 = pnand %p138, %p139
      %p141 = pneg %p140
      // Predicated region
      $region29: #{tpu_custom_call.1} parent=5 // pred_check
        _
      $region30: #{tpu_custom_call.1} parent=5 // pred_check_branch
        %143 = sbr.rel (%p140) target = $region32
      $region31: #{tpu_custom_call.1} parent=5 // pred_region
        %s144 = ssub.s32 %s12, 1
        %p145 = scmp.lt.s32.totalorder %s17, 1
        %s146 = scalar_select %p145, %s17, 1
        %s147 = smul.addr %s146, 8
        %s148 = scalar_lea.vmem %s0, %s147
        %p149 = pneg %p38
        %p150 = pneg %p35
        %p151 = pneg %p59
        %p152 = pneg %p56
        %p153 = pneg %p80
        %p154 = pneg %p77
        %p155 = pneg %p106
        %p156 = pneg %p103
        %s157 = sand.u32 %s93, 1
        %s158 = scalar_lea.sflag [#allocation3], %s157
        %s159 = sand.u32 %s93, 1
        %s160 = smul.addr %s159, 8
        %s161 = scalar_lea.vmem [#allocation2], %s160
        %p162 = scmp.lt.s32.totalorder %s17, 1
        %s163 = scalar_select %p162, %s17, 1
        %s164 = smul.addr %s163, 8
        %s165 = scalar_lea.vmem %s0, %s164
        %v166 = vld [vmem:[%s165] sm:$0xff]
        %v167 = vlaneseq
        %v168 = vand.u32 %v167, 127
        %169 = vset.pattern.permute.xlu0 0
        %170 = vperm.xlu0 %169, %v166
        %v171 = vpop.permute.xlu0 %170
        %vm172 = vcmp.eq.s32.totalorder %v171, %v168
        %v173 = vsel %vm172, 1, 0
        %v174 = vcvt.s32.f32 %v173
        %v175 = vld [vmem:[%s1] sm:$0xff]
        %v176 = vld [vmem:[%s1 + $0x8] sm:$0xff]
        %v177 = vld [vmem:[%s1 + $0x10] sm:$0xff]
        %v178 = vld [vmem:[%s1 + $0x18] sm:$0xff]
        %v179 = vld [vmem:[%s1 + $0x20] sm:$0xff]
        %v180 = vld [vmem:[%s1 + $0x28] sm:$0xff]
        %v181 = vld [vmem:[%s1 + $0x30] sm:$0x3]
        %v182 = vld [vmem:[%s2] sm:$0xff]
        %vm183 = vcmask 408576
        %v185 = vsel %vm183, %v174, 0
        %vm187 = vcmask 1041408
        %v189 = vsel %vm187, %v181, 0
        %191 = vmatprep.subr.mxu0 0.0
        %v192 = vand.u32 %v175, 4294901760
        %193 = vmatpush1.msra.mxu0 %v192
        %194 = vmatprep.subr.mxu0 0.0
        %v195 = vand.u32 %v176, 4294901760
        %196 = vmatpush1.msra.mxu0 %v195
        %197 = vmatprep.subr.mxu0 0.0
        %v198 = vand.u32 %v177, 4294901760
        %199 = vmatpush1.msra.mxu0 %v198
        %200 = vmatprep.subr.mxu0 0.0
        %v201 = vand.u32 %v178, 4294901760
        %202 = vmatpush1.msra.mxu0 %v201
        %203 = vmatprep.subr.mxu0 0.0
        %v204 = vand.u32 %v179, 4294901760
        %205 = vmatpush1.msra.mxu0 %v204
        %206 = vmatprep.subr.mxu0 0.0
        %v207 = vand.u32 %v180, 4294901760
        %208 = vmatpush1.msra.mxu0 %v207
        %209 = vmatprep.subr.mxu0 0.0
        %v210 = vand.u32 %v189, 4294901760
        %211 = vmatpush1.msra.mxu0 %v210
        %212 = vmatprep.subr.mxu0 0.0
        %213 = vmatpush1.msra.mxu0 0.0
        %214 = vmatprep.subr.mxu0 0.0
        %215 = vmatpush1.msra.mxu0 0.0
        %216 = vmatprep.subr.mxu0 0.0
        %217 = vmatpush1.msra.mxu0 0.0
        %218 = vmatprep.subr.mxu0 0.0
        %219 = vmatpush1.msra.mxu0 0.0
        %220 = vmatprep.subr.mxu0 0.0
        %221 = vmatpush1.msra.mxu0 0.0
        %222 = vmatprep.subr.mxu0 0.0
        %223 = vmatpush1.msra.mxu0 0.0
        %224 = vmatprep.subr.mxu0 0.0
        %225 = vmatpush1.msra.mxu0 0.0
        %226 = vmatprep.subr.mxu0 0.0
        %227 = vmatpush1.msra.mxu0 0.0
        %228 = vmatprep.subr.mxu0 0.0
        %229 = vmatpush1.msra.mxu0 0.0
        %230 = vmatprep.subr.mxu0 0.0
        %231 = vmatpush1.msra.mxu0 0.0
        %232 = vmatprep.subr.mxu0 0.0
        %233 = vmatpush1.msra.mxu0 0.0
        %234 = vmatprep.subr.mxu0 0.0
        %235 = vmatpush1.msra.mxu0 0.0
        %236 = vmatprep.subr.mxu0 0.0
        %237 = vmatpush1.msra.mxu0 0.0
        %238 = vmatprep.subr.mxu0 0.0
        %239 = vmatpush1.msra.mxu0 0.0
        %240 = vmatprep.subr.mxu0 0.0
        %241 = vmatpush1.msra.mxu0 0.0
        %242 = vmatprep.subr.mxu0 0.0
        %243 = vmatpush1.msra.mxu0 0.0
        %244 = vmatprep.subr.mxu0 0.0
        %245 = vmatpush1.msra.mxu0 0.0
        %246 = vmatprep.subr.mxu0 0.0
        %247 = vmatpush1.msra.mxu0 0.0
        %248 = vmatprep.subr.mxu0 0.0
        %249 = vmatpush1.msra.mxu0 0.0
        %250 = vmatprep.subr.mxu0 0.0
        %251 = vmatpush1.msra.mxu0 0.0
        %252 = vmatprep.subr.mxu0 0.0
        %253 = vmatpush1.msra.mxu0 0.0
        %254 = vmatprep.subr.mxu0 0.0
        %255 = vmatpush1.msra.mxu0 0.0
        %256 = vmatprep.subr.mxu0 0.0
        %257 = vmatpush1.msra.mxu0 0.0
        %258 = vmatprep.subr.mxu0 0.0
        %259 = vmatpush1.msra.mxu0 0.0
        %260 = vmatprep.subr.mxu0 0.0
        %261 = vmatpush1.msra.mxu0 0.0
        %262 = vmatprep.mubr.f32.mxu0 0.0
        %v263 = vand.u32 %v185, 4294901760
        %v264 = vsub.f32 %v185, %v263
        %v265 = vand.u32 %v264, 4294901760
        %v266 = vsub.f32 %v264, %v265
        %v267 = vand.u32 %v266, 4294901760
        %268 = vmatmul.mubr.f32.gmra.mrb[0].mxu0 %v267
        %v269 = vpop.f32.mrb[0].mxu0
        %v270 = vadd.f32 %v182, %v269
        %v271 = vpop.f32.mrb[0].mxu0
        %272 = vdwg.mxu0
        %273 = vmatprep.subr.mxu0 0.0
        %v274 = vand.u32 %v175, 4294901760
        %v275 = vsub.f32 %v175, %v274
        %v276 = vand.u32 %v275, 4294901760
        %v277 = vsub.f32 %v275, %v276
        %v278 = vand.u32 %v277, 4294901760
        %279 = vmatpush1.msra.mxu0 %v278
        %280 = vmatprep.subr.mxu0 0.0
        %v281 = vand.u32 %v176, 4294901760
        %v282 = vsub.f32 %v176, %v281
        %v283 = vand.u32 %v282, 4294901760
        %v284 = vsub.f32 %v282, %v283
        %v285 = vand.u32 %v284, 4294901760
        %286 = vmatpush1.msra.mxu0 %v285
        %287 = vmatprep.subr.mxu0 0.0
        %v288 = vand.u32 %v177, 4294901760
        %v289 = vsub.f32 %v177, %v288
        %v290 = vand.u32 %v289, 4294901760
        %v291 = vsub.f32 %v289, %v290
        %v292 = vand.u32 %v291, 4294901760
        %293 = vmatpush1.msra.mxu0 %v292
        %294 = vmatprep.subr.mxu0 0.0
        %v295 = vand.u32 %v178, 4294901760
        %v296 = vsub.f32 %v178, %v295
        %v297 = vand.u32 %v296, 4294901760
        %v298 = vsub.f32 %v296, %v297
        %v299 = vand.u32 %v298, 4294901760
        %300 = vmatpush1.msra.mxu0 %v299
        %301 = vmatprep.subr.mxu0 0.0
        %v302 = vand.u32 %v179, 4294901760
        %v303 = vsub.f32 %v179, %v302
        %v304 = vand.u32 %v303, 4294901760
        %v305 = vsub.f32 %v303, %v304
        %v306 = vand.u32 %v305, 4294901760
        %307 = vmatpush1.msra.mxu0 %v306
        %308 = vmatprep.subr.mxu0 0.0
        %v309 = vand.u32 %v180, 4294901760
        %v310 = vsub.f32 %v180, %v309
        %v311 = vand.u32 %v310, 4294901760
        %v312 = vsub.f32 %v310, %v311
        %v313 = vand.u32 %v312, 4294901760
        %314 = vmatpush1.msra.mxu0 %v313
        %315 = vmatprep.subr.mxu0 0.0
        %v316 = vand.u32 %v189, 4294901760
        %v317 = vsub.f32 %v189, %v316
        %v318 = vand.u32 %v317, 4294901760
        %v319 = vsub.f32 %v317, %v318
        %v320 = vand.u32 %v319, 4294901760
        %321 = vmatpush1.msra.mxu0 %v320
        %322 = vmatprep.subr.mxu0 0.0
        %323 = vmatpush1.msra.mxu0 0.0
        %324 = vmatprep.subr.mxu0 0.0
        %325 = vmatpush1.msra.mxu0 0.0
        %326 = vmatprep.subr.mxu0 0.0
        %327 = vmatpush1.msra.mxu0 0.0
        %328 = vmatprep.subr.mxu0 0.0
        %329 = vmatpush1.msra.mxu0 0.0
        %330 = vmatprep.subr.mxu0 0.0
        %331 = vmatpush1.msra.mxu0 0.0
        %332 = vmatprep.subr.mxu0 0.0
        %333 = vmatpush1.msra.mxu0 0.0
        %334 = vmatprep.subr.mxu0 0.0
        %335 = vmatpush1.msra.mxu0 0.0
        %336 = vmatprep.subr.mxu0 0.0
        %337 = vmatpush1.msra.mxu0 0.0
        %338 = vmatprep.subr.mxu0 0.0
        %339 = vmatpush1.msra.mxu0 0.0
        %340 = vmatprep.subr.mxu0 0.0
        %341 = vmatpush1.msra.mxu0 0.0
        %342 = vmatprep.subr.mxu0 0.0
        %343 = vmatpush1.msra.mxu0 0.0
        %344 = vmatprep.subr.mxu0 0.0
        %345 = vmatpush1.msra.mxu0 0.0
        %346 = vmatprep.subr.mxu0 0.0
        %347 = vmatpush1.msra.mxu0 0.0
        %348 = vmatprep.subr.mxu0 0.0
        %349 = vmatpush1.msra.mxu0 0.0
        %350 = vmatprep.subr.mxu0 0.0
        %351 = vmatpush1.msra.mxu0 0.0
        %352 = vmatprep.subr.mxu0 0.0
        %353 = vmatpush1.msra.mxu0 0.0
        %354 = vmatprep.subr.mxu0 0.0
        %355 = vmatpush1.msra.mxu0 0.0
        %356 = vmatprep.subr.mxu0 0.0
        %357 = vmatpush1.msra.mxu0 0.0
        %358 = vmatprep.subr.mxu0 0.0
        %359 = vmatpush1.msra.mxu0 0.0
        %360 = vmatprep.subr.mxu0 0.0
        %361 = vmatpush1.msra.mxu0 0.0
        %362 = vmatprep.subr.mxu0 0.0
        %363 = vmatpush1.msra.mxu0 0.0
        %364 = vmatprep.subr.mxu0 0.0
        %365 = vmatpush1.msra.mxu0 0.0
        %366 = vmatprep.subr.mxu0 0.0
        %367 = vmatpush1.msra.mxu0 0.0
        %368 = vmatprep.subr.mxu0 0.0
        %369 = vmatpush1.msra.mxu0 0.0
        %370 = vmatprep.subr.mxu0 0.0
        %371 = vmatpush1.msra.mxu0 0.0
        %372 = vmatprep.mubr.f32.mxu0 0.0
        %v373 = vand.u32 %v185, 4294901760
        %374 = vmatmul.mubr.f32.gmra.mrb[0].mxu0 %v373
        %v375 = vpop.f32.mrb[0].mxu0
        %v376 = vadd.f32 %v270, %v375
        %v377 = vpop.f32.mrb[0].mxu0
        %378 = vdwg.mxu0
        %379 = vmatprep.subr.mxu0 0.0
        %v380 = vand.u32 %v175, 4294901760
        %v381 = vsub.f32 %v175, %v380
        %382 = vmatpush1.msra.mxu0 %v381
        %383 = vmatprep.subr.mxu0 0.0
        %v384 = vand.u32 %v176, 4294901760
        %v385 = vsub.f32 %v176, %v384
        %386 = vmatpush1.msra.mxu0 %v385
        %387 = vmatprep.subr.mxu0 0.0
        %v388 = vand.u32 %v177, 4294901760
        %v389 = vsub.f32 %v177, %v388
        %390 = vmatpush1.msra.mxu0 %v389
        %391 = vmatprep.subr.mxu0 0.0
        %v392 = vand.u32 %v178, 4294901760
        %v393 = vsub.f32 %v178, %v392
        %394 = vmatpush1.msra.mxu0 %v393
        %395 = vmatprep.subr.mxu0 0.0
        %v396 = vand.u32 %v179, 4294901760
        %v397 = vsub.f32 %v179, %v396
        %398 = vmatpush1.msra.mxu0 %v397
        %399 = vmatprep.subr.mxu0 0.0
        %v400 = vand.u32 %v180, 4294901760
        %v401 = vsub.f32 %v180, %v400
        %402 = vmatpush1.msra.mxu0 %v401
        %403 = vmatprep.subr.mxu0 0.0
        %v404 = vand.u32 %v189, 4294901760
        %v405 = vsub.f32 %v189, %v404
        %406 = vmatpush1.msra.mxu0 %v405
        %407 = vmatprep.subr.mxu0 0.0
        %408 = vmatpush1.msra.mxu0 0.0
        %409 = vmatprep.subr.mxu0 0.0
        %410 = vmatpush1.msra.mxu0 0.0
        %411 = vmatprep.subr.mxu0 0.0
        %412 = vmatpush1.msra.mxu0 0.0
        %413 = vmatprep.subr.mxu0 0.0
        %414 = vmatpush1.msra.mxu0 0.0
        %415 = vmatprep.subr.mxu0 0.0
        %416 = vmatpush1.msra.mxu0 0.0
        %417 = vmatprep.subr.mxu0 0.0
        %418 = vmatpush1.msra.mxu0 0.0
        %419 = vmatprep.subr.mxu0 0.0
        %420 = vmatpush1.msra.mxu0 0.0
        %421 = vmatprep.subr.mxu0 0.0
        %422 = vmatpush1.msra.mxu0 0.0
        %423 = vmatprep.subr.mxu0 0.0
        %424 = vmatpush1.msra.mxu0 0.0
        %425 = vmatprep.subr.mxu0 0.0
        %426 = vmatpush1.msra.mxu0 0.0
        %427 = vmatprep.subr.mxu0 0.0
        %428 = vmatpush1.msra.mxu0 0.0
        %429 = vmatprep.subr.mxu0 0.0
        %430 = vmatpush1.msra.mxu0 0.0
        %431 = vmatprep.subr.mxu0 0.0
        %432 = vmatpush1.msra.mxu0 0.0
        %433 = vmatprep.subr.mxu0 0.0
        %434 = vmatpush1.msra.mxu0 0.0
        %435 = vmatprep.subr.mxu0 0.0
        %436 = vmatpush1.msra.mxu0 0.0
        %437 = vmatprep.subr.mxu0 0.0
        %438 = vmatpush1.msra.mxu0 0.0
        %439 = vmatprep.subr.mxu0 0.0
        %440 = vmatpush1.msra.mxu0 0.0
        %441 = vmatprep.subr.mxu0 0.0
        %442 = vmatpush1.msra.mxu0 0.0
        %443 = vmatprep.subr.mxu0 0.0
        %444 = vmatpush1.msra.mxu0 0.0
        %445 = vmatprep.subr.mxu0 0.0
        %446 = vmatpush1.msra.mxu0 0.0
        %447 = vmatprep.subr.mxu0 0.0
        %448 = vmatpush1.msra.mxu0 0.0
        %449 = vmatprep.subr.mxu0 0.0
        %450 = vmatpush1.msra.mxu0 0.0
        %451 = vmatprep.subr.mxu0 0.0
        %452 = vmatpush1.msra.mxu0 0.0
        %453 = vmatprep.subr.mxu0 0.0
        %454 = vmatpush1.msra.mxu0 0.0
        %455 = vmatprep.subr.mxu0 0.0
        %456 = vmatpush1.msra.mxu0 0.0
        %457 = vmatprep.mubr.f32.mxu0 0.0
        %v458 = vand.u32 %v185, 4294901760
        %v459 = vsub.f32 %v185, %v458
        %460 = vmatmul.mubr.f32.gmra.mrb[0].mxu0 %v459
        %v461 = vpop.f32.mrb[0].mxu0
        %v462 = vadd.f32 %v376, %v461
        %v463 = vpop.f32.mrb[0].mxu0
        %464 = vdwg.mxu0
        %465 = vmatprep.subr.mxu0 0.0
        %v466 = vand.u32 %v175, 4294901760
        %467 = vmatpush1.msra.mxu0 %v466
        %468 = vmatprep.subr.mxu0 0.0
        %v469 = vand.u32 %v176, 4294901760
        %470 = vmatpush1.msra.mxu0 %v469
        %471 = vmatprep.subr.mxu0 0.0
        %v472 = vand.u32 %v177, 4294901760
        %473 = vmatpush1.msra.mxu0 %v472
        %474 = vmatprep.subr.mxu0 0.0
        %v475 = vand.u32 %v178, 4294901760
        %476 = vmatpush1.msra.mxu0 %v475
        %477 = vmatprep.subr.mxu0 0.0
        %v478 = vand.u32 %v179, 4294901760
        %479 = vmatpush1.msra.mxu0 %v478
        %480 = vmatprep.subr.mxu0 0.0
        %v481 = vand.u32 %v180, 4294901760
        %482 = vmatpush1.msra.mxu0 %v481
        %483 = vmatprep.subr.mxu0 0.0
        %v484 = vand.u32 %v189, 4294901760
        %485 = vmatpush1.msra.mxu0 %v484
        %486 = vmatprep.subr.mxu0 0.0
        %487 = vmatpush1.msra.mxu0 0.0
        %488 = vmatprep.subr.mxu0 0.0
        %489 = vmatpush1.msra.mxu0 0.0
        %490 = vmatprep.subr.mxu0 0.0
        %491 = vmatpush1.msra.mxu0 0.0
        %492 = vmatprep.subr.mxu0 0.0
        %493 = vmatpush1.msra.mxu0 0.0
        %494 = vmatprep.subr.mxu0 0.0
        %495 = vmatpush1.msra.mxu0 0.0
        %496 = vmatprep.subr.mxu0 0.0
        %497 = vmatpush1.msra.mxu0 0.0
        %498 = vmatprep.subr.mxu0 0.0
        %499 = vmatpush1.msra.mxu0 0.0
        %500 = vmatprep.subr.mxu0 0.0
        %501 = vmatpush1.msra.mxu0 0.0
        %502 = vmatprep.subr.mxu0 0.0
        %503 = vmatpush1.msra.mxu0 0.0
        %504 = vmatprep.subr.mxu0 0.0
        %505 = vmatpush1.msra.mxu0 0.0
        %506 = vmatprep.subr.mxu0 0.0
        %507 = vmatpush1.msra.mxu0 0.0
        %508 = vmatprep.subr.mxu0 0.0
        %509 = vmatpush1.msra.mxu0 0.0
        %510 = vmatprep.subr.mxu0 0.0
        %511 = vmatpush1.msra.mxu0 0.0
        %512 = vmatprep.subr.mxu0 0.0
        %513 = vmatpush1.msra.mxu0 0.0
        %514 = vmatprep.subr.mxu0 0.0
        %515 = vmatpush1.msra.mxu0 0.0
        %516 = vmatprep.subr.mxu0 0.0
        %517 = vmatpush1.msra.mxu0 0.0
        %518 = vmatprep.subr.mxu0 0.0
        %519 = vmatpush1.msra.mxu0 0.0
        %520 = vmatprep.subr.mxu0 0.0
        %521 = vmatpush1.msra.mxu0 0.0
        %522 = vmatprep.subr.mxu0 0.0
        %523 = vmatpush1.msra.mxu0 0.0
        %524 = vmatprep.subr.mxu0 0.0
        %525 = vmatpush1.msra.mxu0 0.0
        %526 = vmatprep.subr.mxu0 0.0
        %527 = vmatpush1.msra.mxu0 0.0
        %528 = vmatprep.subr.mxu0 0.0
        %529 = vmatpush1.msra.mxu0 0.0
        %530 = vmatprep.subr.mxu0 0.0
        %531 = vmatpush1.msra.mxu0 0.0
        %532 = vmatprep.subr.mxu0 0.0
        %533 = vmatpush1.msra.mxu0 0.0
        %534 = vmatprep.subr.mxu0 0.0
        %535 = vmatpush1.msra.mxu0 0.0
        %536 = vmatprep.mubr.f32.mxu0 0.0
        %v537 = vand.u32 %v185, 4294901760
        %v538 = vsub.f32 %v185, %v537
        %v539 = vand.u32 %v538, 4294901760
        %540 = vmatmul.mubr.f32.gmra.mrb[0].mxu0 %v539
        %v541 = vpop.f32.mrb[0].mxu0
        %v542 = vadd.f32 %v462, %v541
        %v543 = vpop.f32.mrb[0].mxu0
        %544 = vdwg.mxu0
        %545 = vmatprep.subr.mxu0 0.0
        %v546 = vand.u32 %v175, 4294901760
        %v547 = vsub.f32 %v175, %v546
        %v548 = vand.u32 %v547, 4294901760
        %549 = vmatpush1.msra.mxu0 %v548
        %550 = vmatprep.subr.mxu0 0.0
        %v551 = vand.u32 %v176, 4294901760
        %v552 = vsub.f32 %v176, %v551
        %v553 = vand.u32 %v552, 4294901760
        %554 = vmatpush1.msra.mxu0 %v553
        %555 = vmatprep.subr.mxu0 0.0
        %v556 = vand.u32 %v177, 4294901760
        %v557 = vsub.f32 %v177, %v556
        %v558 = vand.u32 %v557, 4294901760
        %559 = vmatpush1.msra.mxu0 %v558
        %560 = vmatprep.subr.mxu0 0.0
        %v561 = vand.u32 %v178, 4294901760
        %v562 = vsub.f32 %v178, %v561
        %v563 = vand.u32 %v562, 4294901760
        %564 = vmatpush1.msra.mxu0 %v563
        %565 = vmatprep.subr.mxu0 0.0
        %v566 = vand.u32 %v179, 4294901760
        %v567 = vsub.f32 %v179, %v566
        %v568 = vand.u32 %v567, 4294901760
        %569 = vmatpush1.msra.mxu0 %v568
        %570 = vmatprep.subr.mxu0 0.0
        %v571 = vand.u32 %v180, 4294901760
        %v572 = vsub.f32 %v180, %v571
        %v573 = vand.u32 %v572, 4294901760
        %574 = vmatpush1.msra.mxu0 %v573
        %575 = vmatprep.subr.mxu0 0.0
        %v576 = vand.u32 %v189, 4294901760
        %v577 = vsub.f32 %v189, %v576
        %v578 = vand.u32 %v577, 4294901760
        %579 = vmatpush1.msra.mxu0 %v578
        %580 = vmatprep.subr.mxu0 0.0
        %581 = vmatpush1.msra.mxu0 0.0
        %582 = vmatprep.subr.mxu0 0.0
        %583 = vmatpush1.msra.mxu0 0.0
        %584 = vmatprep.subr.mxu0 0.0
        %585 = vmatpush1.msra.mxu0 0.0
        %586 = vmatprep.subr.mxu0 0.0
        %587 = vmatpush1.msra.mxu0 0.0
        %588 = vmatprep.subr.mxu0 0.0
        %589 = vmatpush1.msra.mxu0 0.0
        %590 = vmatprep.subr.mxu0 0.0
        %591 = vmatpush1.msra.mxu0 0.0
        %592 = vmatprep.subr.mxu0 0.0
        %593 = vmatpush1.msra.mxu0 0.0
        %594 = vmatprep.subr.mxu0 0.0
        %595 = vmatpush1.msra.mxu0 0.0
        %596 = vmatprep.subr.mxu0 0.0
        %597 = vmatpush1.msra.mxu0 0.0
        %598 = vmatprep.subr.mxu0 0.0
        %599 = vmatpush1.msra.mxu0 0.0
        %600 = vmatprep.subr.mxu0 0.0
        %601 = vmatpush1.msra.mxu0 0.0
        %602 = vmatprep.subr.mxu0 0.0
        %603 = vmatpush1.msra.mxu0 0.0
        %604 = vmatprep.subr.mxu0 0.0
        %605 = vmatpush1.msra.mxu0 0.0
        %606 = vmatprep.subr.mxu0 0.0
        %607 = vmatpush1.msra.mxu0 0.0
        %608 = vmatprep.subr.mxu0 0.0
        %609 = vmatpush1.msra.mxu0 0.0
        %610 = vmatprep.subr.mxu0 0.0
        %611 = vmatpush1.msra.mxu0 0.0
        %612 = vmatprep.subr.mxu0 0.0
        %613 = vmatpush1.msra.mxu0 0.0
        %614 = vmatprep.subr.mxu0 0.0
        %615 = vmatpush1.msra.mxu0 0.0
        %616 = vmatprep.subr.mxu0 0.0
        %617 = vmatpush1.msra.mxu0 0.0
        %618 = vmatprep.subr.mxu0 0.0
        %619 = vmatpush1.msra.mxu0 0.0
        %620 = vmatprep.subr.mxu0 0.0
        %621 = vmatpush1.msra.mxu0 0.0
        %622 = vmatprep.subr.mxu0 0.0
        %623 = vmatpush1.msra.mxu0 0.0
        %624 = vmatprep.subr.mxu0 0.0
        %625 = vmatpush1.msra.mxu0 0.0
        %626 = vmatprep.subr.mxu0 0.0
        %627 = vmatpush1.msra.mxu0 0.0
        %628 = vmatprep.subr.mxu0 0.0
        %629 = vmatpush1.msra.mxu0 0.0
        %630 = vmatprep.mubr.f32.mxu0 0.0
        %v631 = vand.u32 %v185, 4294901760
        %632 = vmatmul.mubr.f32.gmra.mrb[0].mxu0 %v631
        %v633 = vpop.f32.mrb[0].mxu0
        %v634 = vadd.f32 %v542, %v633
        %v635 = vpop.f32.mrb[0].mxu0
        %636 = vdwg.mxu0
        %637 = vmatprep.subr.mxu0 0.0
        %v638 = vand.u32 %v175, 4294901760
        %639 = vmatpush1.msra.mxu0 %v638
        %640 = vmatprep.subr.mxu0 0.0
        %v641 = vand.u32 %v176, 4294901760
        %642 = vmatpush1.msra.mxu0 %v641
        %643 = vmatprep.subr.mxu0 0.0
        %v644 = vand.u32 %v177, 4294901760
        %645 = vmatpush1.msra.mxu0 %v644
        %646 = vmatprep.subr.mxu0 0.0
        %v647 = vand.u32 %v178, 4294901760
        %648 = vmatpush1.msra.mxu0 %v647
        %649 = vmatprep.subr.mxu0 0.0
        %v650 = vand.u32 %v179, 4294901760
        %651 = vmatpush1.msra.mxu0 %v650
        %652 = vmatprep.subr.mxu0 0.0
        %v653 = vand.u32 %v180, 4294901760
        %654 = vmatpush1.msra.mxu0 %v653
        %655 = vmatprep.subr.mxu0 0.0
        %v656 = vand.u32 %v189, 4294901760
        %657 = vmatpush1.msra.mxu0 %v656
        %658 = vmatprep.subr.mxu0 0.0
        %659 = vmatpush1.msra.mxu0 0.0
        %660 = vmatprep.subr.mxu0 0.0
        %661 = vmatpush1.msra.mxu0 0.0
        %662 = vmatprep.subr.mxu0 0.0
        %663 = vmatpush1.msra.mxu0 0.0
        %664 = vmatprep.subr.mxu0 0.0
        %665 = vmatpush1.msra.mxu0 0.0
        %666 = vmatprep.subr.mxu0 0.0
        %667 = vmatpush1.msra.mxu0 0.0
        %668 = vmatprep.subr.mxu0 0.0
        %669 = vmatpush1.msra.mxu0 0.0
        %670 = vmatprep.subr.mxu0 0.0
        %671 = vmatpush1.msra.mxu0 0.0
        %672 = vmatprep.subr.mxu0 0.0
        %673 = vmatpush1.msra.mxu0 0.0
        %674 = vmatprep.subr.mxu0 0.0
        %675 = vmatpush1.msra.mxu0 0.0
        %676 = vmatprep.subr.mxu0 0.0
        %677 = vmatpush1.msra.mxu0 0.0
        %678 = vmatprep.subr.mxu0 0.0
        %679 = vmatpush1.msra.mxu0 0.0
        %680 = vmatprep.subr.mxu0 0.0
        %681 = vmatpush1.msra.mxu0 0.0
        %682 = vmatprep.subr.mxu0 0.0
        %683 = vmatpush1.msra.mxu0 0.0
        %684 = vmatprep.subr.mxu0 0.0
        %685 = vmatpush1.msra.mxu0 0.0
        %686 = vmatprep.subr.mxu0 0.0
        %687 = vmatpush1.msra.mxu0 0.0
        %688 = vmatprep.subr.mxu0 0.0
        %689 = vmatpush1.msra.mxu0 0.0
        %690 = vmatprep.subr.mxu0 0.0
        %691 = vmatpush1.msra.mxu0 0.0
        %692 = vmatprep.subr.mxu0 0.0
        %693 = vmatpush1.msra.mxu0 0.0
        %694 = vmatprep.subr.mxu0 0.0
        %695 = vmatpush1.msra.mxu0 0.0
        %696 = vmatprep.subr.mxu0 0.0
        %697 = vmatpush1.msra.mxu0 0.0
        %698 = vmatprep.subr.mxu0 0.0
        %699 = vmatpush1.msra.mxu0 0.0
        %700 = vmatprep.subr.mxu0 0.0
        %701 = vmatpush1.msra.mxu0 0.0
        %702 = vmatprep.subr.mxu0 0.0
        %703 = vmatpush1.msra.mxu0 0.0
        %704 = vmatprep.subr.mxu0 0.0
        %705 = vmatpush1.msra.mxu0 0.0
        %706 = vmatprep.subr.mxu0 0.0
        %707 = vmatpush1.msra.mxu0 0.0
        %708 = vmatprep.mubr.f32.mxu0 0.0
        %v709 = vand.u32 %v185, 4294901760
        %710 = vmatmul.mubr.f32.gmra.mrb[0].mxu0 %v709
        %v711 = vpop.f32.mrb[0].mxu0
        %v712 = vadd.f32 %v634, %v711
        %v713 = vpop.f32.mrb[0].mxu0
        %714 = vdwg.mxu0
        %vm715 = vcmask 261120
        %716 = vst.msk [vmem:[%s161] sm:$0xff] %vm715, %v712
        %s717 = sand.u32 %s93, 1
        %s718 = scalar_lea.sflag [#allocation3], %s717
        %s719 = sand.u32 %s93, 1
        %s720 = smul.addr %s719, 8
        %s721 = scalar_lea.vmem [#allocation2], %s720
        // Predicated region
        $region33: #{tpu_custom_call.1} parent=31 // pred_check
          %p722 = pneg %p103
        $region34: #{tpu_custom_call.1} parent=31 // pred_check_branch
          %724 = sbr.rel (%p722) target = $region36
        $region35: #{tpu_custom_call.1} parent=31 // pred_region
          %s726 = ssub.s32 128, 128
          %727 = vsyncadd %s718, %s726
          %s728 = smul.addr %s17, 128
          %s729 = scalar_lea.hbm %s3, %s728
          %s731 = sshll.u32 %s721, 4
          %s732 = int_to_ptr.vmem [resolvable:$true] %s731
          %734 = dma.vmem_to_hbm [thread:$0]  %s732, 128, %s729, %s718
        $region36: #{tpu_custom_call.1} parent=31 // pred_fallthru
          _
      $region32: #{tpu_custom_call.1} parent=5 // pred_fallthru
        _
      %p735 = scmp.le.s32.totalorder 2, %s12
      // Predicated region
      $region37: #{tpu_custom_call.1} parent=5 // pred_check
        %p736 = pneg %p735
      $region38: #{tpu_custom_call.1} parent=5 // pred_check_branch
        %738 = sbr.rel (%p736) target = $region40
      $region39: #{tpu_custom_call.1} parent=5 // pred_region
        %s739 = ssub.s32 %s12, 2
        // Predicated region
        $region41: #{tpu_custom_call.1} parent=39 // pred_check
          %p740 = pneg %p109
        $region42: #{tpu_custom_call.1} parent=39 // pred_check_branch
          %742 = sbr.rel (%p740) target = $region44
        $region43: #{tpu_custom_call.1} parent=39 // pred_region
          %s743 = sand.u32 %s94, 1
          %s744 = scalar_lea.sflag [#allocation3], %s743
          %s745 = sand.u32 %s94, 1
          %s746 = smul.addr %s745, 8
          %s747 = scalar_lea.vmem [#allocation2], %s746
          %748 = dma.done %s744, 128
        $region44: #{tpu_custom_call.1} parent=39 // pred_fallthru
          _
      $region40: #{tpu_custom_call.1} parent=5 // pred_fallthru
        _
    $region6: #{tpu_custom_call.1} parent=1 // loop_footer
      %s16 = sadd.s32 1, %s12
    $region7: #{tpu_custom_call.1} parent=1 // loop_footer_branch
      %11 = sbr.rel target = $region3
    $region8: #{tpu_custom_call.1} parent=1 // loop_exit
      _
    %749 = vsyncpa [#allocation3], 1
    %s750 = scalar_lea.sflag [#allocation3], 1
    %751 = vsyncpa %s750, 1

</llo_original>
